<compile_context>
chip_gen: v6e
topology: v6e:2x2x1
jax: 0.10.0
libtpu: 0.0.40
codegen_flags: <defaults>
</compile_context>

<pallas_src>
import jax
import jax.numpy as jnp
from jax.experimental import pallas as pl
from jax.experimental.pallas import tpu as pltpu


def _make_outconv_kernel(H, W, Cin, Cout, B):
    HW = H * W
    PAD = W + 1          # zero halo on each side of the flattened spatial axis

    def kernel(x_ref, w_ref, b_ref, o_ref, taps_ref):
        # x_ref:    (B, Cin, P)     zero-halo-padded, spatially-flattened images
        # w_ref:    (Cout, 9*Cin)   resident weight tile, col = (dy*3+dx)*Cin+ci
        # b_ref:    (Cout, 1)
        # o_ref:    (B, Cout, HW)   H*W on lanes -> lane-dense stores
        # taps_ref: (9*Cin, B*HW)   VMEM scratch: stacked "im2col" taps
        #
        # Column masks (built once; no row masks needed -- the W+1 halo already
        # zero-fills out-of-image rows).  Pre-broadcast so the where's don't
        # re-broadcast per tap.
        ww = jax.lax.broadcasted_iota(jnp.int32, (1, HW), 1) % W
        mask_l = jnp.broadcast_to(ww > 0, (Cin, HW))        # dx == 0 taps
        mask_r = jnp.broadcast_to(ww < W - 1, (Cin, HW))    # dx == 2 taps

        for b in range(B):                 # B is small & static -> unrolled
            for dy in range(3):
                start = PAD + (dy - 1) * W
                center = x_ref[b, :, start:start + HW]       # (Cin, HW), lane-dense
                # Off-center taps via XLU lane rotation of the center load.
                # The only lanes where the rotation wraps to a wrong value
                # (ww == 0 for the left tap, ww == W-1 for the right tap) are
                # exactly the lanes the column masks zero out; out-of-image
                # rows are already zero thanks to the halo.
                left = jnp.where(mask_l, pltpu.roll(center, 1, axis=1), 0.0)
                # shift = HW-1 is the non-negative equivalent of shift = -1.
                right = jnp.where(mask_r, pltpu.roll(center, HW - 1, axis=1), 0.0)

                r0 = (dy * 3) * Cin
                c0 = b * HW
                taps_ref[r0:r0 + Cin, c0:c0 + HW] = left
                taps_ref[r0 + Cin:r0 + 2 * Cin, c0:c0 + HW] = center
                taps_ref[r0 + 2 * Cin:r0 + 3 * Cin, c0:c0 + HW] = right

        # Single fused MXU matmul over all 9 taps and all B images:
        #   (Cout, 9*Cin) @ (9*Cin, B*HW) -> (Cout, B*HW), f32 accumulation.
        acc = jnp.dot(w_ref[...], taps_ref[...],
                      preferred_element_type=jnp.float32)
        acc = acc + b_ref[...].astype(jnp.float32)           # broadcast bias

        for b in range(B):
            o_ref[b] = acc[:, b * HW:(b + 1) * HW].astype(o_ref.dtype)

    return kernel


def out_conv(x_nchw, weight, bias, block_batch=None):
    """Conv2d(kernel=3, stride=1, padding=1) forward.

    Args:
      x_nchw: (N, Cin, H, W) float32
      weight: (Cout, Cin, 3, 3) float32   (PyTorch convention)
      bias:   (Cout,) float32
      block_batch: images per grid step (None -> auto)
    Returns:
      (N, Cout, H, W) float32
    """
    N, Cin, H, W = x_nchw.shape
    Cout = weight.shape[0]
    HW = H * W
    PAD = W + 1
    P = HW + 2 * PAD
    itemsize = x_nchw.dtype.itemsize

    # Stay in NCHW: flatten spatial dims (free) and add a small 1-D zero halo
    # on the flat axis.  No transposes anywhere in the wrapper.
    x_flat = jnp.pad(x_nchw.reshape(N, Cin, HW), ((0, 0), (0, 0), (PAD, PAD)))

    # (Cout, Cin, 3, 3) -> (Cout, 3, 3, Cin) -> (Cout, 9*Cin): one tiny tile
    # with a constant index_map -> resident in VMEM for the whole grid.
    w2d = jnp.transpose(weight, (0, 2, 3, 1)).reshape(Cout, 9 * Cin)
    b2d = bias.reshape(Cout, 1)

    # ---- choose images per grid step (B) -----------------------------------
    # Per-image VMEM: double-buffered x and out blocks + taps scratch.
    per_image = (itemsize * (2 * Cin * P + 2 * Cout * HW)
                 + 4 * 9 * Cin * HW)
    if block_batch is None:
        B = 1
        for cand in range(1, N + 1):
            if N % cand:
                continue
            if cand > 16:                       # bound kernel unrolling
                continue
            if cand * per_image > (24 << 20):   # VMEM budget per step
                continue
            if N >= 2 and (N // cand) < 2:      # keep >=2 steps for v7x's 2 TCs
                continue
            B = cand
    else:
        B = block_batch
    assert N % B == 0, "block_batch must divide the batch size"

    need = (itemsize * (2 * B * Cin * P + 2 * B * Cout * HW)
            + 4 * 9 * Cin * B * HW
            + itemsize * 2 * (Cout * 9 * Cin + Cout))
    vmem_limit = int(max(32 << 20, min(128 << 20, 2 * need)))

    kernel = _make_outconv_kernel(H, W, Cin, Cout, B)

    out_flat = pl.pallas_call(
        kernel,
        out_shape=jax.ShapeDtypeStruct((N, Cout, HW), x_nchw.dtype),
        grid_spec=pltpu.PrefetchScalarGridSpec(
            num_scalar_prefetch=0,
            grid=(N // B,),
            in_specs=[
                pl.BlockSpec((B, Cin, P), lambda n: (n, 0, 0)),
                pl.BlockSpec((Cout, 9 * Cin), lambda n: (0, 0)),
                pl.BlockSpec((Cout, 1), lambda n: (0, 0)),
            ],
            out_specs=pl.BlockSpec((B, Cout, HW), lambda n: (n, 0, 0)),
            scratch_shapes=[pltpu.VMEM((9 * Cin, B * HW), jnp.float32)],
        ),
        compiler_params=pltpu.CompilerParams(
            dimension_semantics=("parallel",),
            vmem_limit_bytes=vmem_limit),
    )(x_flat, w2d, b2d)

    return out_flat.reshape(N, Cout, H, W)


if __name__ == "__main__":
    # Small shapes consistent with the module: batch=2, in_channels=4,
    # out_channels=3, spatial 16x16.
    N, Cin, Cout, H, W = 2, 4, 3, 16, 16

    key = jax.random.PRNGKey(0)
    kx, kw, kb = jax.random.split(key, 3)

    fan_in = Cin * 3 * 3
    bound = 1.0 / (fan_in ** 0.5)
    x = jax.random.normal(kx, (N, Cin, H, W), dtype=jnp.float32)
    weight = jax.random.uniform(kw, (Cout, Cin, 3, 3), dtype=jnp.float32,
                                minval=-bound, maxval=bound)
    bias = jax.random.uniform(kb, (Cout,), dtype=jnp.float32,
                              minval=-bound, maxval=bound)

    out = out_conv(x, weight, bias)
    out = jax.block_until_ready(out)

    # Sanity check against XLA's conv (same padding semantics).
    ref = jax.lax.conv_general_dilated(
        x, weight, window_strides=(1, 1), padding=((1, 1), (1, 1)),
        dimension_numbers=("NCHW", "OIHW", "NCHW"),
    ) + bias.reshape(1, Cout, 1, 1)
    assert out.shape == (N, Cout, H, W)
    assert jnp.allclose(out, ref, atol=1e-4, rtol=1e-4)

    print("KERNEL_OK")
</pallas_src>

<mosaic_0001>
module attributes {stable_mosaic.version = 11 : i64} {
  func.func @kernel(%arg0: i32, %arg1: memref<1x4x290xf32, #tpu.memory_space<vmem>>, %arg2: memref<3x36xf32, #tpu.memory_space<vmem>>, %arg3: memref<3x1xf32, #tpu.memory_space<vmem>>, %arg4: memref<1x3x256xf32, #tpu.memory_space<vmem>>, %arg5: memref<36x256xf32, #tpu.memory_space<vmem>>) attributes {dimension_semantics = [#tpu.dimension_semantics<parallel>], iteration_bounds = array<i64: 2>, scalar_prefetch = 0 : i64, scratch_operands = 1 : i64, tpu.core_type = #tpu.core_type<tc>, window_params = [{transform_indices = @transform_0, window_bounds = array<i64: 1, 4, 290>}, {pipeline_mode = #tpu.pipeline_mode<synchronous>, transform_indices = @transform_1, window_bounds = array<i64: 3, 36>}, {pipeline_mode = #tpu.pipeline_mode<synchronous>, transform_indices = @transform_2, window_bounds = array<i64: 3, 1>}, {transform_indices = @transform_3, window_bounds = array<i64: 1, 3, 256>}]} {
    %0 = tpu.iota {dimensions = array<i32: 1>} : vector<1x256xi32>
    %c16_i32 = arith.constant 16 : i32
    %c0_i32 = arith.constant 0 : i32
    %1 = arith.cmpi eq, %c16_i32, %c0_i32 : i32
    %c1_i32 = arith.constant 1 : i32
    %2 = arith.select %1, %c1_i32, %c16_i32 : i32
    %3 = vector.broadcast %2 : i32 to vector<1x256xi32>
    %4 = arith.remsi %0, %3 : vector<1x256xi32>
    %c0_i32_0 = arith.constant 0 : i32
    %5 = vector.broadcast %c0_i32_0 : i32 to vector<1x256xi32>
    %6 = arith.cmpi ne, %4, %5 : vector<1x256xi32>
    %c0_i32_1 = arith.constant 0 : i32
    %7 = vector.broadcast %c0_i32_1 : i32 to vector<1x256xi32>
    %8 = arith.cmpi slt, %4, %7 : vector<1x256xi32>
    %c0_i32_2 = arith.constant 0 : i32
    %9 = arith.cmpi slt, %2, %c0_i32_2 : i32
    %10 = vector.broadcast %9 : i1 to vector<1x256xi1>
    %11 = vector.broadcast %10 : vector<1x256xi1> to vector<1x256xi1>
    %12 = arith.xori %8, %11 : vector<1x256xi1>
    %13 = arith.andi %12, %6 : vector<1x256xi1>
    %14 = vector.broadcast %2 : i32 to vector<1x256xi32>
    %15 = arith.addi %4, %14 : vector<1x256xi32>
    %16 = arith.select %13, %15, %4 : vector<1x256xi1>, vector<1x256xi32>
    %c0_i32_3 = arith.constant 0 : i32
    %17 = vector.broadcast %c0_i32_3 : i32 to vector<1x256xi32>
    %18 = arith.cmpi sgt, %16, %17 : vector<1x256xi32>
    %19 = vector.shape_cast %18 : vector<1x256xi1> to vector<1x256xi1>
    %20 = vector.broadcast %19 : vector<1x256xi1> to vector<4x256xi1>
    %c15_i32 = arith.constant 15 : i32
    %21 = vector.broadcast %c15_i32 : i32 to vector<1x256xi32>
    %22 = arith.cmpi slt, %16, %21 : vector<1x256xi32>
    %23 = vector.shape_cast %22 : vector<1x256xi1> to vector<1x256xi1>
    %24 = vector.broadcast %23 : vector<1x256xi1> to vector<4x256xi1>
    %c0 = arith.constant 0 : index
    %c0_4 = arith.constant 0 : index
    %c1 = arith.constant 1 : index
    %25 = vector.load %arg1[%c0, %c0_4, %c1] : memref<1x4x290xf32, #tpu.memory_space<vmem>>, vector<1x4x256xf32>
    %26 = vector.shape_cast %25 : vector<1x4x256xf32> to vector<4x256xf32>
    %c1_i32_5 = arith.constant 1 : i32
    %27 = tpu.dynamic_rotate %26 by %c1_i32_5 dim 1 : vector<4x256xf32>, i32 -> vector<4x256xf32>
    %cst = arith.constant 0.000000e+00 : f32
    %28 = vector.broadcast %cst : f32 to vector<4x256xf32>
    %29 = arith.select %20, %27, %28 : vector<4x256xi1>, vector<4x256xf32>
    %c255_i32 = arith.constant 255 : i32
    %30 = tpu.dynamic_rotate %26 by %c255_i32 dim 1 : vector<4x256xf32>, i32 -> vector<4x256xf32>
    %cst_6 = arith.constant 0.000000e+00 : f32
    %31 = vector.broadcast %cst_6 : f32 to vector<4x256xf32>
    %32 = arith.select %24, %30, %31 : vector<4x256xi1>, vector<4x256xf32>
    %c0_7 = arith.constant 0 : index
    %c0_8 = arith.constant 0 : index
    %33 = vector.load %arg5[%c0_7, %c0_8] : memref<36x256xf32, #tpu.memory_space<vmem>>, vector<4x256xf32>
    tpu.vector_store %arg5[%c0_7, %c0_8], %29 {strides = array<i32>} : memref<36x256xf32, #tpu.memory_space<vmem>>, vector<4x256xf32>,
    %c4 = arith.constant 4 : index
    %c0_9 = arith.constant 0 : index
    %34 = vector.load %arg5[%c4, %c0_9] : memref<36x256xf32, #tpu.memory_space<vmem>>, vector<4x256xf32>
    tpu.vector_store %arg5[%c4, %c0_9], %26 {strides = array<i32>} : memref<36x256xf32, #tpu.memory_space<vmem>>, vector<4x256xf32>,
    %c8 = arith.constant 8 : index
    %c0_10 = arith.constant 0 : index
    %35 = vector.load %arg5[%c8, %c0_10] : memref<36x256xf32, #tpu.memory_space<vmem>>, vector<4x256xf32>
    tpu.vector_store %arg5[%c8, %c0_10], %32 {strides = array<i32>} : memref<36x256xf32, #tpu.memory_space<vmem>>, vector<4x256xf32>,
    %c0_11 = arith.constant 0 : index
    %c0_12 = arith.constant 0 : index
    %c17 = arith.constant 17 : index
    %36 = vector.load %arg1[%c0_11, %c0_12, %c17] : memref<1x4x290xf32, #tpu.memory_space<vmem>>, vector<1x4x256xf32>
    %37 = vector.shape_cast %36 : vector<1x4x256xf32> to vector<4x256xf32>
    %c1_i32_13 = arith.constant 1 : i32
    %38 = tpu.dynamic_rotate %37 by %c1_i32_13 dim 1 : vector<4x256xf32>, i32 -> vector<4x256xf32>
    %cst_14 = arith.constant 0.000000e+00 : f32
    %39 = vector.broadcast %cst_14 : f32 to vector<4x256xf32>
    %40 = arith.select %20, %38, %39 : vector<4x256xi1>, vector<4x256xf32>
    %c255_i32_15 = arith.constant 255 : i32
    %41 = tpu.dynamic_rotate %37 by %c255_i32_15 dim 1 : vector<4x256xf32>, i32 -> vector<4x256xf32>
    %cst_16 = arith.constant 0.000000e+00 : f32
    %42 = vector.broadcast %cst_16 : f32 to vector<4x256xf32>
    %43 = arith.select %24, %41, %42 : vector<4x256xi1>, vector<4x256xf32>
    %c12 = arith.constant 12 : index
    %c0_17 = arith.constant 0 : index
    %44 = vector.load %arg5[%c12, %c0_17] : memref<36x256xf32, #tpu.memory_space<vmem>>, vector<4x256xf32>
    tpu.vector_store %arg5[%c12, %c0_17], %40 {strides = array<i32>} : memref<36x256xf32, #tpu.memory_space<vmem>>, vector<4x256xf32>,
    %c16 = arith.constant 16 : index
    %c0_18 = arith.constant 0 : index
    %45 = vector.load %arg5[%c16, %c0_18] : memref<36x256xf32, #tpu.memory_space<vmem>>, vector<4x256xf32>
    tpu.vector_store %arg5[%c16, %c0_18], %37 {strides = array<i32>} : memref<36x256xf32, #tpu.memory_space<vmem>>, vector<4x256xf32>,
    %c20 = arith.constant 20 : index
    %c0_19 = arith.constant 0 : index
    %46 = vector.load %arg5[%c20, %c0_19] : memref<36x256xf32, #tpu.memory_space<vmem>>, vector<4x256xf32>
    tpu.vector_store %arg5[%c20, %c0_19], %43 {strides = array<i32>} : memref<36x256xf32, #tpu.memory_space<vmem>>, vector<4x256xf32>,
    %c0_20 = arith.constant 0 : index
    %c0_21 = arith.constant 0 : index
    %c33 = arith.constant 33 : index
    %47 = vector.load %arg1[%c0_20, %c0_21, %c33] : memref<1x4x290xf32, #tpu.memory_space<vmem>>, vector<1x4x256xf32>
    %48 = vector.shape_cast %47 : vector<1x4x256xf32> to vector<4x256xf32>
    %c1_i32_22 = arith.constant 1 : i32
    %49 = tpu.dynamic_rotate %48 by %c1_i32_22 dim 1 : vector<4x256xf32>, i32 -> vector<4x256xf32>
    %cst_23 = arith.constant 0.000000e+00 : f32
    %50 = vector.broadcast %cst_23 : f32 to vector<4x256xf32>
    %51 = arith.select %20, %49, %50 : vector<4x256xi1>, vector<4x256xf32>
    %c255_i32_24 = arith.constant 255 : i32
    %52 = tpu.dynamic_rotate %48 by %c255_i32_24 dim 1 : vector<4x256xf32>, i32 -> vector<4x256xf32>
    %cst_25 = arith.constant 0.000000e+00 : f32
    %53 = vector.broadcast %cst_25 : f32 to vector<4x256xf32>
    %54 = arith.select %24, %52, %53 : vector<4x256xi1>, vector<4x256xf32>
    %c24 = arith.constant 24 : index
    %c0_26 = arith.constant 0 : index
    %55 = vector.load %arg5[%c24, %c0_26] : memref<36x256xf32, #tpu.memory_space<vmem>>, vector<4x256xf32>
    tpu.vector_store %arg5[%c24, %c0_26], %51 {strides = array<i32>} : memref<36x256xf32, #tpu.memory_space<vmem>>, vector<4x256xf32>,
    %c28 = arith.constant 28 : index
    %c0_27 = arith.constant 0 : index
    %56 = vector.load %arg5[%c28, %c0_27] : memref<36x256xf32, #tpu.memory_space<vmem>>, vector<4x256xf32>
    tpu.vector_store %arg5[%c28, %c0_27], %48 {strides = array<i32>} : memref<36x256xf32, #tpu.memory_space<vmem>>, vector<4x256xf32>,
    %c32 = arith.constant 32 : index
    %c0_28 = arith.constant 0 : index
    %57 = vector.load %arg5[%c32, %c0_28] : memref<36x256xf32, #tpu.memory_space<vmem>>, vector<4x256xf32>
    tpu.vector_store %arg5[%c32, %c0_28], %54 {strides = array<i32>} : memref<36x256xf32, #tpu.memory_space<vmem>>, vector<4x256xf32>,
    %c0_29 = arith.constant 0 : index
    %c0_30 = arith.constant 0 : index
    %58 = vector.load %arg2[%c0_29, %c0_30] : memref<3x36xf32, #tpu.memory_space<vmem>>, vector<3x36xf32>
    %c0_31 = arith.constant 0 : index
    %c0_32 = arith.constant 0 : index
    %59 = vector.load %arg5[%c0_31, %c0_32] : memref<36x256xf32, #tpu.memory_space<vmem>>, vector<36x256xf32>
    %cst_33 = arith.constant dense<0.000000e+00> : vector<3x256xf32>
    %60 = tpu.matmul %58, %59, %cst_33 {dimension_numbers = #tpu.dot_dimension_numbers<[1], [0], [0], [1], [0, 0, 1, 1], [], []>} : vector<3x36xf32>, vector<36x256xf32>, vector<3x256xf32> -> vector<3x256xf32>
    %c0_34 = arith.constant 0 : index
    %c0_35 = arith.constant 0 : index
    %61 = vector.load %arg3[%c0_34, %c0_35] : memref<3x1xf32, #tpu.memory_space<vmem>>, vector<3x1xf32>
    %62 = vector.broadcast %61 : vector<3x1xf32> to vector<3x256xf32>
    %63 = arith.addf %60, %62 : vector<3x256xf32>
    %c0_36 = arith.constant 0 : index
    %c0_37 = arith.constant 0 : index
    %c0_38 = arith.constant 0 : index
    %64 = vector.load %arg4[%c0_36, %c0_37, %c0_38] : memref<1x3x256xf32, #tpu.memory_space<vmem>>, vector<1x3x256xf32>
    %65 = vector.shape_cast %64 : vector<1x3x256xf32> to vector<3x256xf32>
    %66 = vector.shape_cast %63 : vector<3x256xf32> to vector<1x3x256xf32>
    tpu.vector_store %arg4[%c0_36, %c0_37, %c0_38], %66 {strides = array<i32>} : memref<1x3x256xf32, #tpu.memory_space<vmem>>, vector<1x3x256xf32>,
    return
  }
  func.func @transform_0(%arg0: i32) -> (i32, i32, i32) {
    %c0_i32 = arith.constant 0 : i32
    %c0_i32_0 = arith.constant 0 : i32
    %c0_i32_1 = arith.constant 0 : i32
    return %arg0, %c0_i32, %c0_i32_0 : i32, i32, i32
  }
  func.func @transform_1(%arg0: i32) -> (i32, i32) {
    %c0_i32 = arith.constant 0 : i32
    %c0_i32_0 = arith.constant 0 : i32
    %c0_i32_1 = arith.constant 0 : i32
    return %c0_i32, %c0_i32_0 : i32, i32
  }
  func.func @transform_2(%arg0: i32) -> (i32, i32) {
    %c0_i32 = arith.constant 0 : i32
    %c0_i32_0 = arith.constant 0 : i32
    %c0_i32_1 = arith.constant 0 : i32
    return %c0_i32, %c0_i32_0 : i32, i32
  }
  func.func @transform_3(%arg0: i32) -> (i32, i32, i32) {
    %c0_i32 = arith.constant 0 : i32
    %c0_i32_0 = arith.constant 0 : i32
    %c0_i32_1 = arith.constant 0 : i32
    return %arg0, %c0_i32, %c0_i32_0 : i32, i32, i32
  }
}

</mosaic_0001>

<llo_original>
// kernel: tpu_custom_call.1
$region0: #{tpu_custom_call.1}
  #allocation0 [shape = 'u32[]', space=smem, size = 0x4, offset = 0x4, fixed_abs, tag = 'smem constant byte address 0x4 - core index']
  #allocation1 [shape = 'u32[144,128]{1,0:T(1,128)}', space=vmem, size = 0x12000, scoped, tag = 'internal scratch']
  #allocation2 [shape = 'f32[36,256]{1,0:T(8,128)}', space=vmem, size = 0xa000, scoped, tag = 'scratch operand']
  %s0 = inlined_call_operand.hbm [shape: f32[2,4,290], index: 0, kind: input, shape index: {}]
  %s1 = inlined_call_operand.vmem [shape: f32[3,36], index: 1, kind: input, shape index: {}]
  %s2 = inlined_call_operand.vmem [shape: f32[3,1], index: 2, kind: input, shape index: {}]
  %s3 = inlined_call_operand.vmem [shape: f32[2,3,256], index: 3, kind: output, shape index: {}]
  %s4 = sld [smem:[#allocation0]]
  $region49: #{tpu_custom_call.1} parent=0
    _
  %s6 = ssub.s32 1, %s4
  %s7 = scalar_select 0, %s6, %s4
  $region1: #{tpu_custom_call.1} parent=0
    #allocation3 [shape = 'u8[12288]{0}', space=vmem, size = 0x3000, scoped, tag = 'input window, operand 0']
    #allocation4 [shape = 's32[2]{0}', space=sflag, size = 0x8, scoped, tag = 'scoped memory for tpu_custom_call.1']
    %8 = vsyncpa [#allocation4], 0
    %s9 = scalar_lea.sflag [#allocation4], 1
    %10 = vsyncpa %s9, 0
    loop: start=0, step=1, limit=4
    $region2: #{tpu_custom_call.1} parent=1 // loop_pre_header
      _
    $region3: #{tpu_custom_call.1} parent=1 // loop_header
      %s12 = sphi 0, %s16
      %p13 = scmp.ge.s32.totalorder %s12, 4
      %s22 = sphi 0, %s24
      %s25 = sphi 0, %s22
      %s26 = sphi 0, %s25
      %s42 = sphi 0, %s26
      %s46 = sphi 0, %s46
      %s48 = sphi 0, %s46
      %s49 = sphi 0, %s48
      %s63 = sphi 0, %s49
      %s67 = sphi 0, %s67
      %s69 = sphi 0, %s67
      %s70 = sphi 0, %s69
      %s84 = sphi 0, %s70
      %s90 = sphi 0, %s92
      %s93 = sphi 0, %s90
      %s94 = sphi 0, %s93
      %s110 = sphi 0, %s94
    $region4: #{tpu_custom_call.1} parent=1 // loop_header_branch
      %15 = sbr.rel (%p13) target = $region8
    $region5: #{tpu_custom_call.1} parent=1 // loop_body
      %s17 = ssub.s32 %s12, 1
      %s18 = ssub.s32 %s12, 2
      %s19 = sadd.s32 %s12, 1
      %s20 = ssub.s32 %s12, %s19
      %p21 = scmp.eq.s32.totalorder %s20, 0
      %s23 = sadd.s32 %s22, 1
      %s24 = scalar_select %p21, %s22, %s23
      %p27 = pneg %p21
      %p28 = scmp.eq.s32.totalorder %s12, 1
      %p29 = por %p27, %p28
      %p30 = scmp.ne.s32.totalorder %s22, %s25
      %p31 = scmp.eq.s32.totalorder %s12, 0
      %p32 = por %p30, %p31
      %p33 = scmp.ne.s32.totalorder %s22, %s25
      %p34 = scmp.eq.s32.totalorder %s17, 1
      %p35 = por %p33, %p34
      %p36 = scmp.ne.s32.totalorder %s25, %s26
      %p37 = scmp.eq.s32.totalorder %s17, 0
      %p38 = por %p36, %p37
      %p39 = scmp.ne.s32.totalorder %s25, %s26
      %p40 = scmp.eq.s32.totalorder %s18, 1
      %p41 = por %p39, %p40
      %p43 = scmp.ne.s32.totalorder %s26, %s42
      %p44 = scmp.eq.s32.totalorder %s18, 0
      %p45 = por %p43, %p44
      %s47 = sadd.s32 %s46, 1
      %p50 = scmp.eq.s32.totalorder %s12, 1
      %p51 = scmp.ne.s32.totalorder %s46, %s48
      %p52 = scmp.eq.s32.totalorder %s12, 0
      %p53 = por %p51, %p52
      %p54 = scmp.ne.s32.totalorder %s46, %s48
      %p55 = scmp.eq.s32.totalorder %s17, 1
      %p56 = por %p54, %p55
      %p57 = scmp.ne.s32.totalorder %s48, %s49
      %p58 = scmp.eq.s32.totalorder %s17, 0
      %p59 = por %p57, %p58
      %p60 = scmp.ne.s32.totalorder %s48, %s49
      %p61 = scmp.eq.s32.totalorder %s18, 1
      %p62 = por %p60, %p61
      %p64 = scmp.ne.s32.totalorder %s49, %s63
      %p65 = scmp.eq.s32.totalorder %s18, 0
      %p66 = por %p64, %p65
      %s68 = sadd.s32 %s67, 1
      %p71 = scmp.eq.s32.totalorder %s12, 1
      %p72 = scmp.ne.s32.totalorder %s67, %s69
      %p73 = scmp.eq.s32.totalorder %s12, 0
      %p74 = por %p72, %p73
      %p75 = scmp.ne.s32.totalorder %s67, %s69
      %p76 = scmp.eq.s32.totalorder %s17, 1
      %p77 = por %p75, %p76
      %p78 = scmp.ne.s32.totalorder %s69, %s70
      %p79 = scmp.eq.s32.totalorder %s17, 0
      %p80 = por %p78, %p79
      %p81 = scmp.ne.s32.totalorder %s69, %s70
      %p82 = scmp.eq.s32.totalorder %s18, 1
      %p83 = por %p81, %p82
      %p85 = scmp.ne.s32.totalorder %s70, %s84
      %p86 = scmp.eq.s32.totalorder %s18, 0
      %p87 = por %p85, %p86
      %s88 = ssub.s32 %s12, %s19
      %p89 = scmp.eq.s32.totalorder %s88, 0
      %s91 = sadd.s32 %s90, 1
      %s92 = scalar_select %p89, %s90, %s91
      %p95 = pneg %p89
      %p96 = scmp.eq.s32.totalorder %s12, 1
      %p97 = por %p95, %p96
      %p98 = scmp.ne.s32.totalorder %s90, %s93
      %p99 = scmp.eq.s32.totalorder %s12, 0
      %p100 = por %p98, %p99
      %p101 = scmp.ne.s32.totalorder %s90, %s93
      %p102 = scmp.eq.s32.totalorder %s17, 1
      %p103 = por %p101, %p102
      %p104 = scmp.ne.s32.totalorder %s93, %s94
      %p105 = scmp.eq.s32.totalorder %s17, 0
      %p106 = por %p104, %p105
      %p107 = scmp.ne.s32.totalorder %s93, %s94
      %p108 = scmp.eq.s32.totalorder %s18, 1
      %p109 = por %p107, %p108
      %p111 = scmp.ne.s32.totalorder %s94, %s110
      %p112 = scmp.eq.s32.totalorder %s18, 0
      %p113 = por %p111, %p112
      %p114 = scmp.le.s32.totalorder 1, %s12
      %p115 = scmp.lt.s32.totalorder %s12, 3
      %p116 = pnand %p114, %p115
      %p117 = pneg %p116
      // Predicated region
      $region9: #{tpu_custom_call.1} parent=5 // pred_check
        _
      $region10: #{tpu_custom_call.1} parent=5 // pred_check_branch
        %119 = sbr.rel (%p116) target = $region12
      $region11: #{tpu_custom_call.1} parent=5 // pred_region
        %s120 = ssub.s32 %s12, 1
        // Predicated region
        $region13: #{tpu_custom_call.1} parent=11 // pred_check
          %p121 = pneg %p59
        $region14: #{tpu_custom_call.1} parent=11 // pred_check_branch
          %123 = sbr.rel (%p121) target = $region16
        $region15: #{tpu_custom_call.1} parent=11 // pred_region
          _
        $region16: #{tpu_custom_call.1} parent=11 // pred_fallthru
          _
        // Predicated region
        $region17: #{tpu_custom_call.1} parent=11 // pred_check
          %p124 = pneg %p80
        $region18: #{tpu_custom_call.1} parent=11 // pred_check_branch
          %126 = sbr.rel (%p124) target = $region20
        $region19: #{tpu_custom_call.1} parent=11 // pred_region
          _
        $region20: #{tpu_custom_call.1} parent=11 // pred_fallthru
          _
      $region12: #{tpu_custom_call.1} parent=5 // pred_fallthru
        _
      %p127 = scmp.lt.s32.totalorder %s12, 2
      // Predicated region
      $region21: #{tpu_custom_call.1} parent=5 // pred_check
        %p128 = pneg %p127
      $region22: #{tpu_custom_call.1} parent=5 // pred_check_branch
        %130 = sbr.rel (%p128) target = $region24
      $region23: #{tpu_custom_call.1} parent=5 // pred_region
        // Predicated region
        $region25: #{tpu_custom_call.1} parent=23 // pred_check
          %p131 = pneg %p32
        $region26: #{tpu_custom_call.1} parent=23 // pred_check_branch
          %133 = sbr.rel (%p131) target = $region28
        $region27: #{tpu_custom_call.1} parent=23 // pred_region
          %s134 = sand.u32 %s22, 1
          %s135 = scalar_lea.sflag [#allocation4], %s134
          %s136 = sand.u32 %s22, 1
          %s137 = smul.addr %s136, 12
          %s138 = scalar_lea.vmem [#allocation3], %s137
          %s140 = ssub.s32 192, 192
          %141 = vsyncadd %s135, %s140
          %s142 = smul.addr %s12, 3
          %s143 = smul.addr %s142, 64
          %s144 = scalar_lea.hbm %s0, %s143
          %s146 = sshll.u32 %s138, 4
          %s147 = int_to_ptr.vmem [resolvable:$true] %s146
          %149 = dma.hbm_to_vmem [thread:$0]  %s144, 192, %s147, %s135
        $region28: #{tpu_custom_call.1} parent=23 // pred_fallthru
          _
      $region24: #{tpu_custom_call.1} parent=5 // pred_fallthru
        _
      %p150 = scmp.le.s32.totalorder 1, %s12
      %p151 = scmp.lt.s32.totalorder %s12, 3
      %p152 = pnand %p150, %p151
      %p153 = pneg %p152
      // Predicated region
      $region29: #{tpu_custom_call.1} parent=5 // pred_check
        _
      $region30: #{tpu_custom_call.1} parent=5 // pred_check_branch
        %155 = sbr.rel (%p152) target = $region32
      $region31: #{tpu_custom_call.1} parent=5 // pred_region
        %s156 = ssub.s32 %s12, 1
        %s157 = sand.u32 %s25, 1
        %s158 = scalar_lea.sflag [#allocation4], %s157
        %s159 = sand.u32 %s25, 1
        %s160 = smul.addr %s159, 12
        %s161 = scalar_lea.vmem [#allocation3], %s160
        // Predicated region
        $region33: #{tpu_custom_call.1} parent=31 // pred_check
          %p162 = pneg %p38
        $region34: #{tpu_custom_call.1} parent=31 // pred_check_branch
          %164 = sbr.rel (%p162) target = $region36
        $region35: #{tpu_custom_call.1} parent=31 // pred_region
          %165 = dma.done %s158, 192
        $region36: #{tpu_custom_call.1} parent=31 // pred_fallthru
          _
        %s166 = sand.u32 %s25, 1
        %s167 = scalar_lea.sflag [#allocation4], %s166
        %s168 = sand.u32 %s25, 1
        %s169 = smul.addr %s168, 12
        %s170 = scalar_lea.vmem [#allocation3], %s169
        %p171 = pneg %p38
        %p172 = pneg %p35
        %p173 = pneg %p59
        %p174 = pneg %p56
        %p175 = pneg %p80
        %p176 = pneg %p77
        %p177 = pneg %p106
        %p178 = pneg %p103
        %p179 = scmp.lt.s32.totalorder %s17, 1
        %s180 = scalar_select %p179, %s17, 1
        %s181 = smul.addr %s180, 2
        %s182 = smul.addr %s181, 4
        %s183 = scalar_lea.vmem %s3, %s182
        %p184 = scmp.lt.s32.totalorder %s17, 1
        %s185 = scalar_select %p184, %s17, 1
        %s186 = smul.addr %s185, 2
        %s187 = smul.addr %s186, 4
        %s188 = scalar_lea.vmem %s3, %s187
        %v189 = vlaneseq
        %v190 = vand.u32 %v189, 127
        %v191 = vadd.s32 %v190, 128
        %vm192 = vcmp.lt.s32.totalorder %v190, 0
        %v193 = vsub.s32 0, %v190
        %v194 = vsel %vm192, %v193, %v190
        %v195 = vshrl.u32 %v194, 4
        %v196 = vand.u32 %v194, 15
        %v197 = vsub.s32 0, %v196
        %v198 = vsel %vm192, %v197, %v196
        %vm199 = vcmp.lt.s32.totalorder %v191, 0
        %v200 = vsub.s32 0, %v191
        %v201 = vsel %vm199, %v200, %v191
        %v202 = vshrl.u32 %v201, 4
        %v203 = vand.u32 %v201, 15
        %v204 = vsub.s32 0, %v203
        %v205 = vsel %vm199, %v204, %v203
        %vm206 = vcmp.ne.s32.totalorder %v198, 0
        %vm207 = vcmp.ne.s32.totalorder %v205, 0
        %vm208 = vcmp.lt.s32.totalorder %v198, 0
        %vm209 = vcmp.lt.s32.totalorder %v205, 0
        %vm210 = vmand %vm208, %vm206
        %vm211 = vmand %vm209, %vm207
        %v212 = vadd.s32 %v198, 16
        %v213 = vadd.s32 %v205, 16
        %v214 = vsel %vm210, %v212, %v198
        %v215 = vsel %vm211, %v213, %v205
        %vm216 = vcmp.gt.s32.totalorder %v214, 0
        %vm217 = vcmp.gt.s32.totalorder %v215, 0
        %v218 = vsel %vm216, 1, 0
        %v219 = vsel %vm217, 1, 0
        %vm220 = vcmp.eq.s32.totalorder %v218, 1
        %vm221 = vcmp.eq.s32.totalorder %v219, 1
        %vm222 = vcmp.lt.s32.totalorder %v214, 15
        %vm223 = vcmp.lt.s32.totalorder %v215, 15
        %v224 = vsel %vm222, 1, 0
        %v225 = vsel %vm223, 1, 0
        %vm226 = vcmp.eq.s32.totalorder %v224, 1
        %vm227 = vcmp.eq.s32.totalorder %v225, 1
        %v228 = vld [vmem:[%s161] sm:$0xff]
        %v229 = vld [vmem:[%s161 + $0x8] sm:$0xf]
        %v232 = vcombine.high %v228, %v228
        %233 = vrot.lane.b32.xlu0 %v228, 127
        %v234 = vpop.permute.xlu0 %233
        %235 = vrot.lane.b32.xlu0 %v232, 127
        %v236 = vpop.permute.xlu0 %235
        %237 = vrot.lane.b32.xlu0 %v229, 127
        %v238 = vpop.permute.xlu0 %237
        %vm239 = vcmask 1039360
        %v240 = vsel %vm239, %v234, %v236
        %v241 = vsel %vm239, %v236, %v238
        %244 = vrot.lane.b32.xlu0 %v240, 1
        %v245 = vpop.permute.xlu0 %244
        %246 = vrot.lane.b32.xlu0 %v241, 1
        %v247 = vpop.permute.xlu0 %246
        %vm248 = vcmp.lt.s32.totalorder %v190, 1
        %v249 = vsel %vm248, %v245, %v247
        %v250 = vsel %vm248, %v247, %v245
        %v251 = vsel %vm220, %v250, 0.0
        %v252 = vsel %vm221, %v249, 0.0
        %253 = vrot.lane.b32.xlu0 %v240, 127
        %v254 = vpop.permute.xlu0 %253
        %255 = vrot.lane.b32.xlu0 %v241, 127
        %v256 = vpop.permute.xlu0 %255
        %vm257 = vcmp.lt.s32.totalorder %v190, 127
        %v258 = vsel %vm257, %v254, %v256
        %v259 = vsel %vm257, %v256, %v254
        %v260 = vsel %vm226, %v258, 0.0
        %v261 = vsel %vm227, %v259, 0.0
        %262 = vst [vmem:[#allocation2] sm:$0xf] %v251
        %263 = vst [vmem:[#allocation2 + $0x8] sm:$0xf] %v252
        %v264 = vcombine.low %v228, %v228
        %v265 = vcombine.low %v229, %v229
        %266 = vrot.lane.b32.xlu0 %v264, 127
        %v267 = vpop.permute.xlu0 %266
        %268 = vrot.lane.b32.xlu0 %v265, 127
        %v269 = vpop.permute.xlu0 %268
        %v270 = vsel %vm239, %v267, %v234
        %v271 = vsel %vm239, %v234, %v269
        %274 = vst [vmem:[#allocation2] sm:$0xf0] %v270
        %275 = vst [vmem:[#allocation2 + $0x8] sm:$0xf0] %v271
        %276 = vst [vmem:[#allocation2 + $0x10] sm:$0xf] %v260
        %277 = vst [vmem:[#allocation2 + $0x18] sm:$0xf] %v261
        %v278 = vld [vmem:[%s161] sm:$0xff]
        %v279 = vld [vmem:[%s161 + $0x8] sm:$0xf]
        %v282 = vcombine.high %v278, %v278
        %283 = vrot.lane.b32.xlu0 %v278, 111
        %v284 = vpop.permute.xlu0 %283
        %285 = vrot.lane.b32.xlu0 %v282, 111
        %v286 = vpop.permute.xlu0 %285
        %287 = vrot.lane.b32.xlu0 %v279, 111
        %v288 = vpop.permute.xlu0 %287
        %vm289 = vcmask 908288
        %v290 = vsel %vm289, %v284, %v286
        %v291 = vsel %vm289, %v286, %v288
        %294 = vrot.lane.b32.xlu0 %v290, 1
        %v295 = vpop.permute.xlu0 %294
        %296 = vrot.lane.b32.xlu0 %v291, 1
        %v297 = vpop.permute.xlu0 %296
        %v298 = vsel %vm248, %v295, %v297
        %v299 = vsel %vm248, %v297, %v295
        %v300 = vsel %vm220, %v299, 0.0
        %v301 = vsel %vm221, %v298, 0.0
        %302 = vrot.lane.b32.xlu0 %v290, 127
        %v303 = vpop.permute.xlu0 %302
        %304 = vrot.lane.b32.xlu0 %v291, 127
        %v305 = vpop.permute.xlu0 %304
        %v306 = vsel %vm257, %v303, %v305
        %v307 = vsel %vm257, %v305, %v303
        %v308 = vsel %vm226, %v306, 0.0
        %v309 = vsel %vm227, %v307, 0.0
        %v312 = vrot.slane %v300, 4
        %v313 = vrot.slane %v301, 4
        %316 = vst [vmem:[#allocation2 + $0x10] sm:$0xf0] %v312
        %317 = vst [vmem:[#allocation2 + $0x18] sm:$0xf0] %v313
        %318 = vst [vmem:[#allocation2 + $0x20] sm:$0xf] %v290
        %319 = vst [vmem:[#allocation2 + $0x28] sm:$0xf] %v291
        %v322 = vrot.slane %v308, 4
        %v323 = vrot.slane %v309, 4
        %326 = vst [vmem:[#allocation2 + $0x20] sm:$0xf0] %v322
        %327 = vst [vmem:[#allocation2 + $0x28] sm:$0xf0] %v323
        %v328 = vld [vmem:[%s161] sm:$0xff]
        %v329 = vld [vmem:[%s161 + $0x8] sm:$0xf]
        %v332 = vcombine.high %v328, %v328
        %333 = vrot.lane.b32.xlu0 %v328, 95
        %v334 = vpop.permute.xlu0 %333
        %335 = vrot.lane.b32.xlu0 %v332, 95
        %v336 = vpop.permute.xlu0 %335
        %337 = vrot.lane.b32.xlu0 %v329, 95
        %v338 = vpop.permute.xlu0 %337
        %vm339 = vcmask 777216
        %v340 = vsel %vm339, %v334, %v336
        %v341 = vsel %vm339, %v336, %v338
        %344 = vrot.lane.b32.xlu0 %v340, 1
        %v345 = vpop.permute.xlu0 %344
        %346 = vrot.lane.b32.xlu0 %v341, 1
        %v347 = vpop.permute.xlu0 %346
        %v348 = vsel %vm248, %v345, %v347
        %v349 = vsel %vm248, %v347, %v345
        %v350 = vsel %vm220, %v349, 0.0
        %v351 = vsel %vm221, %v348, 0.0
        %352 = vrot.lane.b32.xlu0 %v340, 127
        %v353 = vpop.permute.xlu0 %352
        %354 = vrot.lane.b32.xlu0 %v341, 127
        %v355 = vpop.permute.xlu0 %354
        %v356 = vsel %vm257, %v353, %v355
        %v357 = vsel %vm257, %v355, %v353
        %v358 = vsel %vm226, %v356, 0.0
        %v359 = vsel %vm227, %v357, 0.0
        %360 = vst [vmem:[#allocation2 + $0x30] sm:$0xf] %v350
        %361 = vst [vmem:[#allocation2 + $0x38] sm:$0xf] %v351
        %v362 = vcombine.low %v328, %v328
        %v363 = vcombine.low %v329, %v329
        %364 = vrot.lane.b32.xlu0 %v362, 95
        %v365 = vpop.permute.xlu0 %364
        %366 = vrot.lane.b32.xlu0 %v363, 95
        %v367 = vpop.permute.xlu0 %366
        %v368 = vsel %vm339, %v365, %v334
        %v369 = vsel %vm339, %v334, %v367
        %372 = vst [vmem:[#allocation2 + $0x30] sm:$0xf0] %v368
        %373 = vst [vmem:[#allocation2 + $0x38] sm:$0xf0] %v369
        %374 = vst [vmem:[#allocation2 + $0x40] sm:$0xf] %v358
        %375 = vst [vmem:[#allocation2 + $0x48] sm:$0xf] %v359
        %v376 = vld [vmem:[%s1] sm:$0x7]
        %v377 = vld [vmem:[#allocation2] sm:$0xff]
        %v378 = vld [vmem:[#allocation2 + $0x8] sm:$0xff]
        %v379 = vld [vmem:[#allocation2 + $0x10] sm:$0xff]
        %v380 = vld [vmem:[#allocation2 + $0x18] sm:$0xff]
        %v381 = vld [vmem:[#allocation2 + $0x20] sm:$0xff]
        %v382 = vld [vmem:[#allocation2 + $0x28] sm:$0xff]
        %v383 = vld [vmem:[#allocation2 + $0x30] sm:$0xff]
        %v384 = vld [vmem:[#allocation2 + $0x38] sm:$0xff]
        %v385 = vld [vmem:[#allocation2 + $0x40] sm:$0xf]
        %v386 = vld [vmem:[#allocation2 + $0x48] sm:$0xf]
        %v387 = vld [vmem:[%s2] sm:$0x7]
        %389 = vset.pattern.permute.xlu0 0
        %390 = vperm.xlu0 %389, %v387
        %v391 = vpop.permute.xlu0 %390
        %vm393 = vcmask 293888
        %v395 = vsel %vm393, %v376, 0
        %vm397 = vcmask 1043456
        %v399 = vsel %vm397, %v385, 0
        %v402 = vsel %vm397, %v386, 0
        %404 = vmatprep.subr.mxu0 0.0
        %405 = vmatpush1.msra.mxu0 0.0
        %406 = vmatprep.subr.mxu0 0.0
        %407 = vmatpush1.msra.mxu0 0.0
        %408 = vmatprep.subr.mxu0 0.0
        %409 = vmatpush1.msra.mxu0 0.0
        %410 = vmatprep.subr.mxu0 0.0
        %411 = vmatpush1.msra.mxu0 0.0
        %412 = vmatprep.subr.mxu0 0.0
        %413 = vmatpush1.msra.mxu0 0.0
        %414 = vmatprep.subr.mxu0 0.0
        %415 = vmatpush1.msra.mxu0 0.0
        %416 = vmatprep.subr.mxu0 0.0
        %417 = vmatpush1.msra.mxu0 0.0
        %418 = vmatprep.subr.mxu0 0.0
        %419 = vmatpush1.msra.mxu0 0.0
        %420 = vmatprep.subr.mxu0 0.0
        %421 = vmatpush1.msra.mxu0 0.0
        %422 = vmatprep.subr.mxu0 0.0
        %423 = vmatpush1.msra.mxu0 0.0
        %424 = vmatprep.subr.mxu0 0.0
        %425 = vmatpush1.msra.mxu0 0.0
        %426 = vmatprep.subr.mxu0 %v402
        %427 = vmatpush1.msra.mxu0 %v399
        %428 = vmatprep.subr.mxu0 %v384
        %429 = vmatpush1.msra.mxu0 %v383
        %430 = vmatprep.subr.mxu0 %v382
        %431 = vmatpush1.msra.mxu0 %v381
        %432 = vmatprep.subr.mxu0 %v380
        %433 = vmatpush1.msra.mxu0 %v379
        %434 = vmatprep.subr.mxu0 %v378
        %435 = vmatpush1.msra.mxu0 %v377
        %436 = vmatprep.subr.mxu0 0.0
        %437 = vmatpush2.msra.mxu0 0.0
        %438 = vmatprep.subr.mxu0 0.0
        %439 = vmatpush2.msra.mxu0 0.0
        %440 = vmatprep.subr.mxu0 0.0
        %441 = vmatpush2.msra.mxu0 0.0
        %442 = vmatprep.subr.mxu0 0.0
        %443 = vmatpush2.msra.mxu0 0.0
        %444 = vmatprep.subr.mxu0 0.0
        %445 = vmatpush2.msra.mxu0 0.0
        %446 = vmatprep.subr.mxu0 0.0
        %447 = vmatpush2.msra.mxu0 0.0
        %448 = vmatprep.subr.mxu0 0.0
        %449 = vmatpush2.msra.mxu0 0.0
        %450 = vmatprep.subr.mxu0 0.0
        %451 = vmatpush2.msra.mxu0 0.0
        %452 = vmatprep.subr.mxu0 0.0
        %453 = vmatpush2.msra.mxu0 0.0
        %454 = vmatprep.subr.mxu0 0.0
        %455 = vmatpush2.msra.mxu0 0.0
        %456 = vmatprep.subr.mxu0 0.0
        %457 = vmatpush2.msra.mxu0 0.0
        %458 = vmatprep.subr.mxu0 0.0
        %459 = vmatpush2.msra.mxu0 0.0
        %460 = vmatprep.subr.mxu0 0.0
        %461 = vmatpush2.msra.mxu0 0.0
        %462 = vmatprep.subr.mxu0 0.0
        %463 = vmatpush2.msra.mxu0 0.0
        %464 = vmatprep.subr.mxu0 0.0
        %465 = vmatpush2.msra.mxu0 0.0
        %466 = vmatprep.subr.mxu0 0.0
        %467 = vmatpush2.msra.mxu0 0.0
        %468 = vmatprep.mubr.f32.mxu0 0.0
        %469 = vmatmul.mubr.f32.gmra.mxu0 %v395
        %v470 = vpop.f32.mrf.mxu0
        %v471 = vadd.f32 %v391, %v470
        %v472 = vpop.f32.mrf.mxu0
        %v473 = vadd.f32 %v391, %v472
        %474 = vdwg.mxu0
        %v477 = vcombine.low %v471, %v473
        %479 = vst [vmem:[%s188] sm:$0x77] %v477
        %p480 = scmp.lt.s32.totalorder %s17, 1
        %s481 = scalar_select %p480, %s17, 1
        %s482 = smul.addr %s481, 2
        %s483 = smul.addr %s482, 4
        %s484 = scalar_lea.vmem %s3, %s483
        // Predicated region
        $region37: #{tpu_custom_call.1} parent=31 // pred_check
          %p485 = pneg %p103
        $region38: #{tpu_custom_call.1} parent=31 // pred_check_branch
          %487 = sbr.rel (%p485) target = $region40
        $region39: #{tpu_custom_call.1} parent=31 // pred_region
          _
        $region40: #{tpu_custom_call.1} parent=31 // pred_fallthru
          _
      $region32: #{tpu_custom_call.1} parent=5 // pred_fallthru
        _
      %p488 = scmp.le.s32.totalorder 2, %s12
      // Predicated region
      $region41: #{tpu_custom_call.1} parent=5 // pred_check
        %p489 = pneg %p488
      $region42: #{tpu_custom_call.1} parent=5 // pred_check_branch
        %491 = sbr.rel (%p489) target = $region44
      $region43: #{tpu_custom_call.1} parent=5 // pred_region
        %s492 = ssub.s32 %s12, 2
        // Predicated region
        $region45: #{tpu_custom_call.1} parent=43 // pred_check
          %p493 = pneg %p109
        $region46: #{tpu_custom_call.1} parent=43 // pred_check_branch
          %495 = sbr.rel (%p493) target = $region48
        $region47: #{tpu_custom_call.1} parent=43 // pred_region
          %p496 = scmp.lt.s32.totalorder %s18, 1
          %s497 = scalar_select %p496, %s18, 1
          %s498 = smul.addr %s497, 2
          %s499 = smul.addr %s498, 4
          %s500 = scalar_lea.vmem %s3, %s499
        $region48: #{tpu_custom_call.1} parent=43 // pred_fallthru
          _
      $region44: #{tpu_custom_call.1} parent=5 // pred_fallthru
        _
    $region6: #{tpu_custom_call.1} parent=1 // loop_footer
      %s16 = sadd.s32 1, %s12
    $region7: #{tpu_custom_call.1} parent=1 // loop_footer_branch
      %11 = sbr.rel target = $region3
    $region8: #{tpu_custom_call.1} parent=1 // loop_exit
      _
    %501 = vsyncpa [#allocation4], 1
    %s502 = scalar_lea.sflag [#allocation4], 1
    %503 = vsyncpa %s502, 1

</llo_original>
